<compile_context>
chip_gen: v7x
topology: tpu7x:2x2x1
jax: 0.10.0
libtpu: 0.0.40
codegen_flags: <defaults>
</compile_context>

<pallas_src>
import functools

import jax
import jax.numpy as jnp
from jax import lax
from jax.experimental import pallas as pl
from jax.experimental.pallas import tpu as pltpu


def _round_up(x, m):
    return ((x + m - 1) // m) * m


def _pick_row_tile(n_anchor, target=256):
    """Anchor-row tile: multiple of 16 (bf16 sublanes), capped at `target`."""
    t = min(target, _round_up(n_anchor, 16))
    return max(16, _round_up(t, 16))


def _multi_supcon_kernel(afeat_ref, alab_ref, cfeat_ref, clab_ref, crs_ref,
                         out_ref, *, row_tile, n_anchor, n_views, inv_temp,
                         loss_scale, c_threshold, multi, binary_labels):
    """One grid step: losses for `row_tile` anchor rows.

    afeat_ref: (row_tile, D)   streamed anchor-feature tile (padded rows = 0)
    alab_ref:  (row_tile, C)   streamed anchor-label tile   (padded rows = 0)
    cfeat_ref: (N, D)          resident contrast features (all views)
    clab_ref:  (bsz, C)        resident labels (one copy, NOT view-replicated)
    crs_ref:   (1, bsz)        resident per-sample label sums (f32)
    out_ref:   (row_tile, 128) per-anchor-row loss, broadcast across lanes
    """
    i = pl.program_id(0)
    r0 = pl.multiple_of(i * row_tile, row_tile)      # global anchor-row offset
    n_contrast = cfeat_ref.shape[0]                  # N = bsz * n_views (no padding)

    # --- similarity logits on the MXU: anchor @ contrast^T / temperature ----
    s = lax.dot_general(afeat_ref[...], cfeat_ref[...], (((1,), (1,)), ((), ())),
                        preferred_element_type=jnp.float32)
    s = s * inv_temp                                  # (row_tile, N) f32

    # self-contrast mask: global column == global anchor row
    col = lax.broadcasted_iota(jnp.int32, (row_tile, n_contrast), 1)
    row = r0 + lax.broadcasted_iota(jnp.int32, (row_tile, n_contrast), 0)
    not_diag = col != row

    # numerically-stable masked softmax denominator
    logits = s - jnp.max(s, axis=1, keepdims=True)
    z = jnp.sum(jnp.where(not_diag, jnp.exp(logits), 0.0), axis=1, keepdims=True)
    log_z = jnp.log(z)                                # (row_tile, 1)

    # --- Jaccard at (row_tile, bsz) resolution -------------------------------
    alab = alab_ref[...]                              # (row_tile, C)
    clab = clab_ref[...]                              # (bsz, C)
    rs_contrast = crs_ref[...]                        # (1, bsz) f32
    if binary_labels:
        # intersection / union for {0,1} labels, on the MXU
        upper = lax.dot_general(alab, clab, (((1,), (1,)), ((), ())),
                                preferred_element_type=jnp.float32)   # (row_tile, bsz)
        rs_anchor = jnp.sum(alab.astype(jnp.float32), axis=1, keepdims=True)
        lower = rs_anchor + rs_contrast - upper
    else:
        # soft / graded labels keep the exact min/max form (small: bsz, not N)
        # TODO(synk): chunk over the class dim if (row_tile, bsz, C) gets large.
        lt = alab.astype(jnp.float32)[:, None, :]     # (row_tile, 1, C)
        la = clab.astype(jnp.float32)[None, :, :]     # (1, bsz, C)
        upper = jnp.sum(jnp.minimum(lt, la), axis=-1)
        lower = jnp.sum(jnp.maximum(lt, la), axis=-1)

    # divide-free threshold; lower>0 guard keeps all-zero-label rows out of the
    # mask (matches torch, where NaN >= thr evaluates False).
    pos = jnp.logical_and(lower > 0.0, upper >= c_threshold * lower)
    m_small = pos.astype(jnp.float32)                 # (row_tile, bsz) 0/1 mask
    if multi:
        jac = jnp.where(lower > 0.0, upper / lower, 0.0)
        w_small = jnp.where(pos, jac, 0.0)            # mask * multi_val, fused
    else:
        w_small = m_small

    # expand across views (cheap lane copy), zero the self-contrast diagonal
    m_full = jnp.where(not_diag, jnp.tile(m_small, (1, n_views)), 0.0)
    w_full = jnp.where(not_diag, jnp.tile(w_small, (1, n_views)), 0.0)

    # sum(w * log_prob) = sum(w * logits) - logZ * sum(w)   (log_prob never built)
    sum_w = jnp.sum(w_full, axis=1, keepdims=True)
    sum_wl = jnp.sum(w_full * logits, axis=1, keepdims=True)
    denom = jnp.sum(m_full, axis=1, keepdims=True)
    row_loss = loss_scale * (sum_wl - log_z * sum_w) / denom     # (row_tile, 1)

    # zero padded anchor rows; lane-dense store
    valid = (r0 + lax.broadcasted_iota(jnp.int32, (row_tile, 1), 0)) < n_anchor
    row_loss = jnp.where(valid, row_loss, 0.0)
    out_ref[...] = jnp.broadcast_to(row_loss, out_ref.shape).astype(out_ref.dtype)


def _vmem_limit_bytes():
    """Scoped-VMEM limit from the actual chip capacity, with headroom."""
    cap = 64 * 2**20                                   # conservative fallback (v7x)
    try:
        info = pltpu.get_tpu_info()
        cap = int(getattr(info, "vmem_capacity_bytes", cap) or cap)
    except Exception:
        pass
    return int(0.85 * cap)


def multi_supcon_loss(features, labels, *, temperature=0.07, contrast_mode='all',
                      base_temperature=0.07, c_threshold=0.3, multi=True,
                      binary_labels=True, row_tile=None,
                      compute_dtype=jnp.bfloat16):
    """Forward pass of MultiSupConLoss (multi-label `labels` path). Scalar loss."""
    if features.ndim < 3:
        raise ValueError('`features` needs to be [bsz, n_views, ...]')
    if features.ndim > 3:
        features = features.reshape(features.shape[0], features.shape[1], -1)
    bsz, n_views, dim = features.shape
    if labels is None:
        # TODO(synk): labels=None (SimCLR eye-mask) / explicit-`mask` paths of
        # the PyTorch module are not implemented in this kernel.
        raise NotImplementedError('only the multi-label `labels` path is implemented')
    labels = jnp.asarray(labels)
    if labels.ndim < 2:
        raise ValueError('This loss only works with multi-label problems')
    if labels.shape[0] != bsz:
        raise ValueError('Num of labels does not match num of features')
    n_classes = labels.shape[1]

    if contrast_mode == 'one':
        anchor_count = 1
    elif contrast_mode == 'all':
        anchor_count = n_views
    else:
        raise ValueError(f'Unknown mode: {contrast_mode}')

    n_contrast = bsz * n_views
    n_anchor = anchor_count * bsz

    # contrast_feature == torch.cat(torch.unbind(features, dim=1), dim=0)
    feat = features.astype(compute_dtype)
    contrast_feature = jnp.swapaxes(feat, 0, 1).reshape(n_contrast, dim)
    anchor_feature = contrast_feature[:n_anchor]       # 'one' -> first bsz rows

    # Anchor-row tiling: MXU-friendly tile, last tile padded + masked.
    if row_tile is None:
        row_tile = _pick_row_tile(n_anchor)
    row_tile = max(16, _round_up(int(row_tile), 8))
    n_tiles = pl.cdiv(n_anchor, row_tile)
    a_pad = n_tiles * row_tile

    # Label operands: one un-replicated (bsz, C) copy for the contrast side,
    # streamed anchor-side label rows, precomputed per-sample label sums.
    labels_f = labels.astype(jnp.float32)
    label_dtype = jnp.bfloat16 if binary_labels else jnp.float32  # 0/1 exact in bf16
    clab = labels_f.astype(label_dtype)                               # (bsz, C)
    anchor_labels = jnp.tile(labels_f, (anchor_count, 1)).astype(label_dtype)
    crs = jnp.sum(labels_f, axis=1)[None, :]                          # (1, bsz)

    if a_pad > n_anchor:
        pad = a_pad - n_anchor
        anchor_feature = jnp.pad(anchor_feature, ((0, pad), (0, 0)))
        anchor_labels = jnp.pad(anchor_labels, ((0, pad), (0, 0)))

    kernel = functools.partial(
        _multi_supcon_kernel,
        row_tile=row_tile,
        n_anchor=n_anchor,
        n_views=n_views,
        inv_temp=float(1.0 / temperature),
        loss_scale=float(-(temperature / base_temperature)),
        c_threshold=float(c_threshold),
        multi=bool(multi),
        binary_labels=bool(binary_labels))

    def _build(single_buffer_resident):
        # Constant-index resident inputs: request single buffering (their block
        # never changes, so double-buffering only doubles VMEM residency).
        res_kw = {'pipeline_mode': pl.Buffered(1)} if single_buffer_resident else {}
        grid_spec = pltpu.PrefetchScalarGridSpec(
            num_scalar_prefetch=0,
            grid=(n_tiles,),
            in_specs=[
                pl.BlockSpec((row_tile, dim), lambda i: (i, 0)),        # anchor feats
                pl.BlockSpec((row_tile, n_classes), lambda i: (i, 0)),  # anchor labels
                pl.BlockSpec((n_contrast, dim), lambda i: (0, 0), **res_kw),   # resident
                pl.BlockSpec((bsz, n_classes), lambda i: (0, 0), **res_kw),    # resident
                pl.BlockSpec((1, bsz), lambda i: (0, 0), **res_kw),            # resident
            ],
            out_specs=pl.BlockSpec((row_tile, 128), lambda i: (i, 0)),
        )
        return pl.pallas_call(
            kernel,
            out_shape=jax.ShapeDtypeStruct((a_pad, 128), jnp.float32),
            grid_spec=grid_spec,
            compiler_params=pltpu.CompilerParams(
                dimension_semantics=("parallel",),        # independent row tiles
                vmem_limit_bytes=_vmem_limit_bytes()))

    args = (anchor_feature, anchor_labels, contrast_feature, clab, crs)
    try:
        out = _build(True)(*args)
    except Exception:
        # Fallback if this JAX build rejects pipeline_mode=pl.Buffered(1).
        out = _build(False)(*args)

    # TODO(synk): for very large N (>= ~4-8K contrast rows) the contrast dim
    # should become an inner column loop (online softmax) to cap the
    # (row_tile, N) intermediates; not needed at typical contrastive batch sizes.
    return jnp.mean(out[:n_anchor, 0])


def _multi_supcon_reference(features, labels, temperature=0.07, contrast_mode='all',
                            base_temperature=0.07, c_threshold=0.3, multi=True):
    """Pure-JAX replica of the PyTorch MultiSupConLoss forward."""
    features = features.astype(jnp.float32)
    labels = labels.astype(jnp.float32)
    bsz, n_views, dim = features.shape
    mins = jnp.sum(jnp.minimum(labels[:, None, :], labels[None, :, :]), axis=-1)
    maxs = jnp.sum(jnp.maximum(labels[:, None, :], labels[None, :, :]), axis=-1)
    multi_labels = mins / maxs
    mask = jnp.where(multi_labels >= c_threshold, 1.0, 0.0)
    multi_val = multi_labels if multi else jnp.ones_like(multi_labels)
    contrast_count = n_views
    contrast_feature = jnp.swapaxes(features, 0, 1).reshape(n_views * bsz, dim)
    if contrast_mode == 'one':
        anchor_feature, anchor_count = features[:, 0], 1
    else:
        anchor_feature, anchor_count = contrast_feature, contrast_count
    adc = jnp.matmul(anchor_feature, contrast_feature.T,
                     precision=jax.lax.Precision.HIGHEST) / temperature
    logits = adc - jnp.max(adc, axis=1, keepdims=True)
    mask = jnp.tile(mask, (anchor_count, contrast_count))
    multi_val = jnp.tile(multi_val, (anchor_count, contrast_count))
    n_anchor = anchor_count * bsz
    logits_mask = 1.0 - jnp.eye(n_anchor, n_views * bsz, dtype=jnp.float32)
    mask = mask * logits_mask
    exp_logits = jnp.exp(logits) * logits_mask
    log_prob = logits - jnp.log(jnp.sum(exp_logits, axis=1, keepdims=True))
    mean_pos = jnp.sum(mask * (log_prob * multi_val), axis=1) / jnp.sum(mask, axis=1)
    loss = -(temperature / base_temperature) * mean_pos
    return jnp.mean(loss.reshape(anchor_count, bsz))


if __name__ == "__main__":
    key = jax.random.PRNGKey(0)
    kf, kl = jax.random.split(key)
    bsz, n_views, dim, n_classes = 8, 2, 32, 16

    feats = jax.random.normal(kf, (bsz, n_views, dim), dtype=jnp.float32)
    feats = feats / jnp.linalg.norm(feats, axis=-1, keepdims=True)
    # bf16 features: exact MXU products + f32 accumulation, so the f32
    # reference evaluated on the same rounded values matches tightly.
    feats = feats.astype(jnp.bfloat16)

    labels = (jax.random.uniform(kl, (bsz, n_classes)) > 0.55).astype(jnp.float32)
    labels = labels.at[:, 0].set(1.0)   # every sample has at least one positive

    # contrast_mode='all'
    loss_all = jax.block_until_ready(multi_supcon_loss(feats, labels))
    ref_all = _multi_supcon_reference(feats.astype(jnp.float32), labels)
    assert bool(jnp.isfinite(loss_all)), loss_all
    assert jnp.allclose(loss_all, ref_all, rtol=5e-4, atol=5e-4), (loss_all, ref_all)

    # contrast_mode='one' (also exercises the padded last anchor tile)
    loss_one = jax.block_until_ready(
        multi_supcon_loss(feats, labels, contrast_mode='one'))
    ref_one = _multi_supcon_reference(feats.astype(jnp.float32), labels,
                                      contrast_mode='one')
    assert bool(jnp.isfinite(loss_one)), loss_one
    assert jnp.allclose(loss_one, ref_one, rtol=5e-4, atol=5e-4), (loss_one, ref_one)

    print("KERNEL_OK")
</pallas_src>

<mosaic_0001>
module attributes {stable_mosaic.version = 11 : i64} {
  func.func @_multi_supcon_kernel(%arg0: i32, %arg1: memref<16x32xbf16, #tpu.memory_space<vmem>>, %arg2: memref<16x16xbf16, #tpu.memory_space<vmem>>, %arg3: memref<16x32xbf16, #tpu.memory_space<vmem>>, %arg4: memref<8x16xbf16, #tpu.memory_space<vmem>>, %arg5: memref<1x8xf32, #tpu.memory_space<vmem>>, %arg6: memref<16x128xf32, #tpu.memory_space<vmem>>) attributes {dimension_semantics = [#tpu.dimension_semantics<parallel>], iteration_bounds = array<i64: 1>, scalar_prefetch = 0 : i64, scratch_operands = 0 : i64, tpu.core_type = #tpu.core_type<tc>, window_params = [{transform_indices = @transform_0, window_bounds = array<i64: 16, 32>}, {transform_indices = @transform_1, window_bounds = array<i64: 16, 16>}, {pipeline_mode = #tpu.pipeline_mode<synchronous>, transform_indices = @transform_2, window_bounds = array<i64: 16, 32>}, {pipeline_mode = #tpu.pipeline_mode<synchronous>, transform_indices = @transform_3, window_bounds = array<i64: 8, 16>}, {pipeline_mode = #tpu.pipeline_mode<synchronous>, transform_indices = @transform_4, window_bounds = array<i64: 1, 8>}, {transform_indices = @transform_5, window_bounds = array<i64: 16, 128>}]} {
    %c16_i32 = arith.constant 16 : i32
    %0 = arith.muli %arg0, %c16_i32 : i32
    %1 = tpu.assume_multiple %0, 16 : i32
    %c0 = arith.constant 0 : index
    %c0_0 = arith.constant 0 : index
    %2 = vector.load %arg1[%c0, %c0_0] : memref<16x32xbf16, #tpu.memory_space<vmem>>, vector<16x32xbf16>
    %c0_1 = arith.constant 0 : index
    %c0_2 = arith.constant 0 : index
    %3 = vector.load %arg3[%c0_1, %c0_2] : memref<16x32xbf16, #tpu.memory_space<vmem>>, vector<16x32xbf16>
    %cst = arith.constant dense<0.000000e+00> : vector<16x16xf32>
    %4 = tpu.matmul %2, %3, %cst {dimension_numbers = #tpu.dot_dimension_numbers<[1], [1], [0], [0], [0, 0, 1, 0], [], []>} : vector<16x32xbf16>, vector<16x32xbf16>, vector<16x16xf32> -> vector<16x16xf32>
    %cst_3 = arith.constant 14.2857141 : f32
    %5 = vector.broadcast %cst_3 : f32 to vector<16x16xf32>
    %6 = arith.mulf %4, %5 : vector<16x16xf32>
    %7 = tpu.iota {dimensions = array<i32: 1>} : vector<16x16xi32>
    %8 = tpu.iota {dimensions = array<i32: 0>} : vector<16x16xi32>
    %9 = vector.broadcast %1 : i32 to vector<16x16xi32>
    %10 = arith.addi %9, %8 : vector<16x16xi32>
    %11 = arith.cmpi ne, %7, %10 : vector<16x16xi32>
    %cst_4 = arith.constant dense<0xFF800000> : vector<16xf32>
    %12 = vector.multi_reduction <maximumf>, %6, %cst_4 [1] : vector<16x16xf32> to vector<16xf32>
    %13 = vector.shape_cast %12 : vector<16xf32> to vector<16x1xf32>
    %14 = vector.broadcast %13 : vector<16x1xf32> to vector<16x16xf32>
    %15 = arith.subf %6, %14 : vector<16x16xf32>
    %16 = math.exp %15 : vector<16x16xf32>
    %cst_5 = arith.constant 0.000000e+00 : f32
    %17 = vector.broadcast %cst_5 : f32 to vector<16x16xf32>
    %18 = arith.select %11, %16, %17 : vector<16x16xi1>, vector<16x16xf32>
    %cst_6 = arith.constant dense<0.000000e+00> : vector<16xf32>
    %19 = vector.multi_reduction <add>, %18, %cst_6 [1] : vector<16x16xf32> to vector<16xf32>
    %20 = vector.shape_cast %19 : vector<16xf32> to vector<16x1xf32>
    %21 = math.log %20 : vector<16x1xf32>
    %c0_7 = arith.constant 0 : index
    %c0_8 = arith.constant 0 : index
    %22 = vector.load %arg2[%c0_7, %c0_8] : memref<16x16xbf16, #tpu.memory_space<vmem>>, vector<16x16xbf16>
    %c0_9 = arith.constant 0 : index
    %c0_10 = arith.constant 0 : index
    %23 = vector.load %arg4[%c0_9, %c0_10] : memref<8x16xbf16, #tpu.memory_space<vmem>>, vector<8x16xbf16>
    %c0_11 = arith.constant 0 : index
    %c0_12 = arith.constant 0 : index
    %24 = vector.load %arg5[%c0_11, %c0_12] : memref<1x8xf32, #tpu.memory_space<vmem>>, vector<1x8xf32>
    %cst_13 = arith.constant dense<0.000000e+00> : vector<16x8xf32>
    %25 = tpu.matmul %22, %23, %cst_13 {dimension_numbers = #tpu.dot_dimension_numbers<[1], [1], [0], [0], [0, 0, 1, 0], [], []>} : vector<16x16xbf16>, vector<8x16xbf16>, vector<16x8xf32> -> vector<16x8xf32>
    %26 = arith.extf %22 : vector<16x16xbf16> to vector<16x16xf32>
    %cst_14 = arith.constant dense<0.000000e+00> : vector<16xf32>
    %27 = vector.multi_reduction <add>, %26, %cst_14 [1] : vector<16x16xf32> to vector<16xf32>
    %28 = vector.shape_cast %27 : vector<16xf32> to vector<16x1xf32>
    %29 = vector.broadcast %28 : vector<16x1xf32> to vector<16x8xf32>
    %30 = vector.broadcast %24 : vector<1x8xf32> to vector<16x8xf32>
    %31 = arith.addf %29, %30 : vector<16x8xf32>
    %32 = arith.subf %31, %25 : vector<16x8xf32>
    %cst_15 = arith.constant 0.000000e+00 : f32
    %33 = vector.broadcast %cst_15 : f32 to vector<16x8xf32>
    %34 = arith.cmpf ogt, %32, %33 : vector<16x8xf32>
    %cst_16 = arith.constant 3.000000e-01 : f32
    %35 = vector.broadcast %cst_16 : f32 to vector<16x8xf32>
    %36 = arith.mulf %35, %32 : vector<16x8xf32>
    %37 = arith.cmpf oge, %25, %36 : vector<16x8xf32>
    %38 = arith.andi %34, %37 : vector<16x8xi1>
    %39 = arith.extui %38 : vector<16x8xi1> to vector<16x8xi32>
    %40 = arith.sitofp %39 : vector<16x8xi32> to vector<16x8xf32>
    %cst_17 = arith.constant 0.000000e+00 : f32
    %41 = vector.broadcast %cst_17 : f32 to vector<16x8xf32>
    %42 = arith.cmpf ogt, %32, %41 : vector<16x8xf32>
    %43 = arith.divf %25, %32 : vector<16x8xf32>
    %cst_18 = arith.constant 0.000000e+00 : f32
    %44 = vector.broadcast %cst_18 : f32 to vector<16x8xf32>
    %45 = arith.select %42, %43, %44 : vector<16x8xi1>, vector<16x8xf32>
    %cst_19 = arith.constant 0.000000e+00 : f32
    %46 = vector.broadcast %cst_19 : f32 to vector<16x8xf32>
    %47 = arith.select %38, %45, %46 : vector<16x8xi1>, vector<16x8xf32>
    %48 = tpu.concatenate %40, %40 in 1 : vector<16x8xf32>, vector<16x8xf32> -> vector<16x16xf32>
    %cst_20 = arith.constant 0.000000e+00 : f32
    %49 = vector.broadcast %cst_20 : f32 to vector<16x16xf32>
    %50 = arith.select %11, %48, %49 : vector<16x16xi1>, vector<16x16xf32>
    %51 = tpu.concatenate %47, %47 in 1 : vector<16x8xf32>, vector<16x8xf32> -> vector<16x16xf32>
    %cst_21 = arith.constant 0.000000e+00 : f32
    %52 = vector.broadcast %cst_21 : f32 to vector<16x16xf32>
    %53 = arith.select %11, %51, %52 : vector<16x16xi1>, vector<16x16xf32>
    %cst_22 = arith.constant dense<0.000000e+00> : vector<16xf32>
    %54 = vector.multi_reduction <add>, %53, %cst_22 [1] : vector<16x16xf32> to vector<16xf32>
    %55 = vector.shape_cast %54 : vector<16xf32> to vector<16x1xf32>
    %56 = arith.mulf %53, %15 : vector<16x16xf32>
    %cst_23 = arith.constant dense<0.000000e+00> : vector<16xf32>
    %57 = vector.multi_reduction <add>, %56, %cst_23 [1] : vector<16x16xf32> to vector<16xf32>
    %58 = vector.shape_cast %57 : vector<16xf32> to vector<16x1xf32>
    %cst_24 = arith.constant dense<0.000000e+00> : vector<16xf32>
    %59 = vector.multi_reduction <add>, %50, %cst_24 [1] : vector<16x16xf32> to vector<16xf32>
    %60 = vector.shape_cast %59 : vector<16xf32> to vector<16x1xf32>
    %61 = arith.mulf %21, %55 : vector<16x1xf32>
    %62 = arith.subf %58, %61 : vector<16x1xf32>
    %cst_25 = arith.constant -1.000000e+00 : f32
    %63 = vector.broadcast %cst_25 : f32 to vector<16x1xf32>
    %64 = arith.mulf %63, %62 : vector<16x1xf32>
    %65 = arith.divf %64, %60 : vector<16x1xf32>
    %66 = tpu.iota {dimensions = array<i32: 0>} : vector<16x1xi32>
    %67 = vector.broadcast %1 : i32 to vector<16x1xi32>
    %68 = arith.addi %67, %66 : vector<16x1xi32>
    %c16_i32_26 = arith.constant 16 : i32
    %69 = vector.broadcast %c16_i32_26 : i32 to vector<16x1xi32>
    %70 = arith.cmpi slt, %68, %69 : vector<16x1xi32>
    %cst_27 = arith.constant 0.000000e+00 : f32
    %71 = vector.broadcast %cst_27 : f32 to vector<16x1xf32>
    %72 = arith.select %70, %65, %71 : vector<16x1xi1>, vector<16x1xf32>
    %73 = vector.shape_cast %72 : vector<16x1xf32> to vector<16x1xf32>
    %74 = vector.broadcast %73 : vector<16x1xf32> to vector<16x128xf32>
    %c0_28 = arith.constant 0 : index
    %c0_29 = arith.constant 0 : index
    %75 = vector.load %arg6[%c0_28, %c0_29] : memref<16x128xf32, #tpu.memory_space<vmem>>, vector<16x128xf32>
    tpu.vector_store %arg6[%c0_28, %c0_29], %74 {strides = array<i32>} : memref<16x128xf32, #tpu.memory_space<vmem>>, vector<16x128xf32>,
    return
  }
  func.func @transform_0(%arg0: i32) -> (i32, i32) {
    %c0_i32 = arith.constant 0 : i32
    %c0_i32_0 = arith.constant 0 : i32
    return %arg0, %c0_i32 : i32, i32
  }
  func.func @transform_1(%arg0: i32) -> (i32, i32) {
    %c0_i32 = arith.constant 0 : i32
    %c0_i32_0 = arith.constant 0 : i32
    return %arg0, %c0_i32 : i32, i32
  }
  func.func @transform_2(%arg0: i32) -> (i32, i32) {
    %c0_i32 = arith.constant 0 : i32
    %c0_i32_0 = arith.constant 0 : i32
    %c0_i32_1 = arith.constant 0 : i32
    return %c0_i32, %c0_i32_0 : i32, i32
  }
  func.func @transform_3(%arg0: i32) -> (i32, i32) {
    %c0_i32 = arith.constant 0 : i32
    %c0_i32_0 = arith.constant 0 : i32
    %c0_i32_1 = arith.constant 0 : i32
    return %c0_i32, %c0_i32_0 : i32, i32
  }
  func.func @transform_4(%arg0: i32) -> (i32, i32) {
    %c0_i32 = arith.constant 0 : i32
    %c0_i32_0 = arith.constant 0 : i32
    %c0_i32_1 = arith.constant 0 : i32
    return %c0_i32, %c0_i32_0 : i32, i32
  }
  func.func @transform_5(%arg0: i32) -> (i32, i32) {
    %c0_i32 = arith.constant 0 : i32
    %c0_i32_0 = arith.constant 0 : i32
    return %arg0, %c0_i32 : i32, i32
  }
}

module attributes {stable_mosaic.version = 11 : i64} {
  func.func @_multi_supcon_kernel(%arg0: i32, %arg1: memref<16x32xbf16, #tpu.memory_space<vmem>>, %arg2: memref<16x16xbf16, #tpu.memory_space<vmem>>, %arg3: memref<16x32xbf16, #tpu.memory_space<vmem>>, %arg4: memref<8x16xbf16, #tpu.memory_space<vmem>>, %arg5: memref<1x8xf32, #tpu.memory_space<vmem>>, %arg6: memref<16x128xf32, #tpu.memory_space<vmem>>) attributes {dimension_semantics = [#tpu.dimension_semantics<parallel>], iteration_bounds = array<i64: 1>, scalar_prefetch = 0 : i64, scratch_operands = 0 : i64, tpu.core_type = #tpu.core_type<tc>, window_params = [{transform_indices = @transform_0, window_bounds = array<i64: 16, 32>}, {transform_indices = @transform_1, window_bounds = array<i64: 16, 16>}, {pipeline_mode = #tpu.pipeline_mode<synchronous>, transform_indices = @transform_2, window_bounds = array<i64: 16, 32>}, {pipeline_mode = #tpu.pipeline_mode<synchronous>, transform_indices = @transform_3, window_bounds = array<i64: 8, 16>}, {pipeline_mode = #tpu.pipeline_mode<synchronous>, transform_indices = @transform_4, window_bounds = array<i64: 1, 8>}, {transform_indices = @transform_5, window_bounds = array<i64: 16, 128>}]} {
    %c16_i32 = arith.constant 16 : i32
    %0 = arith.muli %arg0, %c16_i32 : i32
    %1 = tpu.assume_multiple %0, 16 : i32
    %c0 = arith.constant 0 : index
    %c0_0 = arith.constant 0 : index
    %2 = vector.load %arg1[%c0, %c0_0] : memref<16x32xbf16, #tpu.memory_space<vmem>>, vector<16x32xbf16>
    %c0_1 = arith.constant 0 : index
    %c0_2 = arith.constant 0 : index
    %3 = vector.load %arg3[%c0_1, %c0_2] : memref<16x32xbf16, #tpu.memory_space<vmem>>, vector<16x32xbf16>
    %cst = arith.constant dense<0.000000e+00> : vector<16x16xf32>
    %4 = tpu.matmul %2, %3, %cst {dimension_numbers = #tpu.dot_dimension_numbers<[1], [1], [0], [0], [0, 0, 1, 0], [], []>} : vector<16x32xbf16>, vector<16x32xbf16>, vector<16x16xf32> -> vector<16x16xf32>
    %cst_3 = arith.constant 14.2857141 : f32
    %5 = vector.broadcast %cst_3 : f32 to vector<16x16xf32>
    %6 = arith.mulf %4, %5 : vector<16x16xf32>
    %7 = tpu.iota {dimensions = array<i32: 1>} : vector<16x16xi32>
    %8 = tpu.iota {dimensions = array<i32: 0>} : vector<16x16xi32>
    %9 = vector.broadcast %1 : i32 to vector<16x16xi32>
    %10 = arith.addi %9, %8 : vector<16x16xi32>
    %11 = arith.cmpi ne, %7, %10 : vector<16x16xi32>
    %cst_4 = arith.constant dense<0xFF800000> : vector<16xf32>
    %12 = vector.multi_reduction <maximumf>, %6, %cst_4 [1] : vector<16x16xf32> to vector<16xf32>
    %13 = vector.shape_cast %12 : vector<16xf32> to vector<16x1xf32>
    %14 = vector.broadcast %13 : vector<16x1xf32> to vector<16x16xf32>
    %15 = arith.subf %6, %14 : vector<16x16xf32>
    %16 = math.exp %15 : vector<16x16xf32>
    %cst_5 = arith.constant 0.000000e+00 : f32
    %17 = vector.broadcast %cst_5 : f32 to vector<16x16xf32>
    %18 = arith.select %11, %16, %17 : vector<16x16xi1>, vector<16x16xf32>
    %cst_6 = arith.constant dense<0.000000e+00> : vector<16xf32>
    %19 = vector.multi_reduction <add>, %18, %cst_6 [1] : vector<16x16xf32> to vector<16xf32>
    %20 = vector.shape_cast %19 : vector<16xf32> to vector<16x1xf32>
    %21 = math.log %20 : vector<16x1xf32>
    %c0_7 = arith.constant 0 : index
    %c0_8 = arith.constant 0 : index
    %22 = vector.load %arg2[%c0_7, %c0_8] : memref<16x16xbf16, #tpu.memory_space<vmem>>, vector<16x16xbf16>
    %c0_9 = arith.constant 0 : index
    %c0_10 = arith.constant 0 : index
    %23 = vector.load %arg4[%c0_9, %c0_10] : memref<8x16xbf16, #tpu.memory_space<vmem>>, vector<8x16xbf16>
    %c0_11 = arith.constant 0 : index
    %c0_12 = arith.constant 0 : index
    %24 = vector.load %arg5[%c0_11, %c0_12] : memref<1x8xf32, #tpu.memory_space<vmem>>, vector<1x8xf32>
    %cst_13 = arith.constant dense<0.000000e+00> : vector<16x8xf32>
    %25 = tpu.matmul %22, %23, %cst_13 {dimension_numbers = #tpu.dot_dimension_numbers<[1], [1], [0], [0], [0, 0, 1, 0], [], []>} : vector<16x16xbf16>, vector<8x16xbf16>, vector<16x8xf32> -> vector<16x8xf32>
    %26 = arith.extf %22 : vector<16x16xbf16> to vector<16x16xf32>
    %cst_14 = arith.constant dense<0.000000e+00> : vector<16xf32>
    %27 = vector.multi_reduction <add>, %26, %cst_14 [1] : vector<16x16xf32> to vector<16xf32>
    %28 = vector.shape_cast %27 : vector<16xf32> to vector<16x1xf32>
    %29 = vector.broadcast %28 : vector<16x1xf32> to vector<16x8xf32>
    %30 = vector.broadcast %24 : vector<1x8xf32> to vector<16x8xf32>
    %31 = arith.addf %29, %30 : vector<16x8xf32>
    %32 = arith.subf %31, %25 : vector<16x8xf32>
    %cst_15 = arith.constant 0.000000e+00 : f32
    %33 = vector.broadcast %cst_15 : f32 to vector<16x8xf32>
    %34 = arith.cmpf ogt, %32, %33 : vector<16x8xf32>
    %cst_16 = arith.constant 3.000000e-01 : f32
    %35 = vector.broadcast %cst_16 : f32 to vector<16x8xf32>
    %36 = arith.mulf %35, %32 : vector<16x8xf32>
    %37 = arith.cmpf oge, %25, %36 : vector<16x8xf32>
    %38 = arith.andi %34, %37 : vector<16x8xi1>
    %39 = arith.extui %38 : vector<16x8xi1> to vector<16x8xi32>
    %40 = arith.sitofp %39 : vector<16x8xi32> to vector<16x8xf32>
    %cst_17 = arith.constant 0.000000e+00 : f32
    %41 = vector.broadcast %cst_17 : f32 to vector<16x8xf32>
    %42 = arith.cmpf ogt, %32, %41 : vector<16x8xf32>
    %43 = arith.divf %25, %32 : vector<16x8xf32>
    %cst_18 = arith.constant 0.000000e+00 : f32
    %44 = vector.broadcast %cst_18 : f32 to vector<16x8xf32>
    %45 = arith.select %42, %43, %44 : vector<16x8xi1>, vector<16x8xf32>
    %cst_19 = arith.constant 0.000000e+00 : f32
    %46 = vector.broadcast %cst_19 : f32 to vector<16x8xf32>
    %47 = arith.select %38, %45, %46 : vector<16x8xi1>, vector<16x8xf32>
    %48 = tpu.concatenate %40, %40 in 1 : vector<16x8xf32>, vector<16x8xf32> -> vector<16x16xf32>
    %cst_20 = arith.constant 0.000000e+00 : f32
    %49 = vector.broadcast %cst_20 : f32 to vector<16x16xf32>
    %50 = arith.select %11, %48, %49 : vector<16x16xi1>, vector<16x16xf32>
    %51 = tpu.concatenate %47, %47 in 1 : vector<16x8xf32>, vector<16x8xf32> -> vector<16x16xf32>
    %cst_21 = arith.constant 0.000000e+00 : f32
    %52 = vector.broadcast %cst_21 : f32 to vector<16x16xf32>
    %53 = arith.select %11, %51, %52 : vector<16x16xi1>, vector<16x16xf32>
    %cst_22 = arith.constant dense<0.000000e+00> : vector<16xf32>
    %54 = vector.multi_reduction <add>, %53, %cst_22 [1] : vector<16x16xf32> to vector<16xf32>
    %55 = vector.shape_cast %54 : vector<16xf32> to vector<16x1xf32>
    %56 = arith.mulf %53, %15 : vector<16x16xf32>
    %cst_23 = arith.constant dense<0.000000e+00> : vector<16xf32>
    %57 = vector.multi_reduction <add>, %56, %cst_23 [1] : vector<16x16xf32> to vector<16xf32>
    %58 = vector.shape_cast %57 : vector<16xf32> to vector<16x1xf32>
    %cst_24 = arith.constant dense<0.000000e+00> : vector<16xf32>
    %59 = vector.multi_reduction <add>, %50, %cst_24 [1] : vector<16x16xf32> to vector<16xf32>
    %60 = vector.shape_cast %59 : vector<16xf32> to vector<16x1xf32>
    %61 = arith.mulf %21, %55 : vector<16x1xf32>
    %62 = arith.subf %58, %61 : vector<16x1xf32>
    %cst_25 = arith.constant -1.000000e+00 : f32
    %63 = vector.broadcast %cst_25 : f32 to vector<16x1xf32>
    %64 = arith.mulf %63, %62 : vector<16x1xf32>
    %65 = arith.divf %64, %60 : vector<16x1xf32>
    %66 = tpu.iota {dimensions = array<i32: 0>} : vector<16x1xi32>
    %67 = vector.broadcast %1 : i32 to vector<16x1xi32>
    %68 = arith.addi %67, %66 : vector<16x1xi32>
    %c16_i32_26 = arith.constant 16 : i32
    %69 = vector.broadcast %c16_i32_26 : i32 to vector<16x1xi32>
    %70 = arith.cmpi slt, %68, %69 : vector<16x1xi32>
    %cst_27 = arith.constant 0.000000e+00 : f32
    %71 = vector.broadcast %cst_27 : f32 to vector<16x1xf32>
    %72 = arith.select %70, %65, %71 : vector<16x1xi1>, vector<16x1xf32>
    %73 = vector.shape_cast %72 : vector<16x1xf32> to vector<16x1xf32>
    %74 = vector.broadcast %73 : vector<16x1xf32> to vector<16x128xf32>
    %c0_28 = arith.constant 0 : index
    %c0_29 = arith.constant 0 : index
    %75 = vector.load %arg6[%c0_28, %c0_29] : memref<16x128xf32, #tpu.memory_space<vmem>>, vector<16x128xf32>
    tpu.vector_store %arg6[%c0_28, %c0_29], %74 {strides = array<i32>} : memref<16x128xf32, #tpu.memory_space<vmem>>, vector<16x128xf32>,
    return
  }
  func.func @transform_0(%arg0: i32) -> (i32, i32) {
    %c0_i32 = arith.constant 0 : i32
    %c0_i32_0 = arith.constant 0 : i32
    return %arg0, %c0_i32 : i32, i32
  }
  func.func @transform_1(%arg0: i32) -> (i32, i32) {
    %c0_i32 = arith.constant 0 : i32
    %c0_i32_0 = arith.constant 0 : i32
    return %arg0, %c0_i32 : i32, i32
  }
  func.func @transform_2(%arg0: i32) -> (i32, i32) {
    %c0_i32 = arith.constant 0 : i32
    %c0_i32_0 = arith.constant 0 : i32
    %c0_i32_1 = arith.constant 0 : i32
    return %c0_i32, %c0_i32_0 : i32, i32
  }
  func.func @transform_3(%arg0: i32) -> (i32, i32) {
    %c0_i32 = arith.constant 0 : i32
    %c0_i32_0 = arith.constant 0 : i32
    %c0_i32_1 = arith.constant 0 : i32
    return %c0_i32, %c0_i32_0 : i32, i32
  }
  func.func @transform_4(%arg0: i32) -> (i32, i32) {
    %c0_i32 = arith.constant 0 : i32
    %c0_i32_0 = arith.constant 0 : i32
    %c0_i32_1 = arith.constant 0 : i32
    return %c0_i32, %c0_i32_0 : i32, i32
  }
  func.func @transform_5(%arg0: i32) -> (i32, i32) {
    %c0_i32 = arith.constant 0 : i32
    %c0_i32_0 = arith.constant 0 : i32
    return %arg0, %c0_i32 : i32, i32
  }
}

</mosaic_0001>

<llo_original>
// kernel: tpu_custom_call.1
$region0: #{tpu_custom_call.1}
  #allocation0 [shape = 'u32[]', space=smem, size = 0x4, offset = 0x4, fixed_abs, tag = 'smem constant byte address 0x4 - core index']
  #allocation1 [shape = 'u32[144,128]{1,0:T(1,128)}', space=vmem, size = 0x12000, scoped, tag = 'internal scratch']
  %s0 = inlined_call_operand.hbm [shape: bf16[16,32], index: 0, kind: input, shape index: {}]
  %s1 = inlined_call_operand.hbm [shape: bf16[16,16], index: 1, kind: input, shape index: {}]
  %s2 = inlined_call_operand.hbm [shape: bf16[16,32], index: 2, kind: input, shape index: {}]
  %s3 = inlined_call_operand.vmem [shape: bf16[8,16], index: 3, kind: input, shape index: {}]
  %s4 = inlined_call_operand.vmem [shape: f32[1,8], index: 4, kind: input, shape index: {}]
  %s5 = inlined_call_operand.hbm [shape: f32[16,128], index: 5, kind: output, shape index: {}]
  %s6 = sld [smem:[#allocation0]]
  $region42: #{tpu_custom_call.1} parent=0
    _
  %s8 = ssub.s32 1, %s6
  %s9 = scalar_select 0, %s8, %s6
  $region1: #{tpu_custom_call.1} parent=0
    #allocation2 [shape = 'u8[4096]{0}', space=vmem, size = 0x1000, scoped, tag = 'input window, operand 0, single buffered']
    #allocation3 [shape = 's32[1]{0}', space=sflag, size = 0x4, scoped, tag = 'scoped memory for tpu_custom_call.1']
    #allocation4 [shape = 's32[1]{0}', space=sflag, size = 0x4, scoped, tag = 'scoped memory for tpu_custom_call.1']
    #allocation5 [shape = 'u8[4096]{0}', space=vmem, size = 0x1000, scoped, tag = 'input window, operand 1, single buffered']
    #allocation6 [shape = 's32[1]{0}', space=sflag, size = 0x4, scoped, tag = 'scoped memory for tpu_custom_call.1']
    #allocation7 [shape = 'u8[4096]{0}', space=vmem, size = 0x1000, scoped, tag = 'input window, operand 2, single buffered']
    #allocation8 [shape = 'u8[8192]{0}', space=vmem, size = 0x2000, scoped, tag = 'output window, operand 0, single buffered']
    %10 = vsyncpa [#allocation3], 0
    %11 = vsyncpa [#allocation6], 0
    %12 = vsyncpa [#allocation4], 0
    // Predicated region
    $region2: #{tpu_custom_call.1} parent=1 // pred_check
      _
    $region3: #{tpu_custom_call.1} parent=1 // pred_check_branch
      %14 = sbr.rel (0) target = $region5
    $region4: #{tpu_custom_call.1} parent=1 // pred_region
      %s16 = ssub.s32 128, 128
      %17 = vsyncadd [#allocation3], %s16
      %s18 = sshll.u32 [#allocation2], 4
      %s19 = int_to_ptr.vmem [resolvable:$true] %s18
      %24 = dma.hbm_to_vmem [thread:$0]  %s0, 128, %s19, [#allocation3], 64, 64, 4
    $region5: #{tpu_custom_call.1} parent=1 // pred_fallthru
      _
    // Predicated region
    $region6: #{tpu_custom_call.1} parent=1 // pred_check
      _
    $region7: #{tpu_custom_call.1} parent=1 // pred_check_branch
      %26 = sbr.rel (0) target = $region9
    $region8: #{tpu_custom_call.1} parent=1 // pred_region
      %s28 = ssub.s32 128, 128
      %29 = vsyncadd [#allocation6], %s28
      %s30 = sshll.u32 [#allocation5], 4
      %s31 = int_to_ptr.vmem [resolvable:$true] %s30
      %36 = dma.hbm_to_vmem [thread:$0]  %s1, 128, %s31, [#allocation6], 64, 64, 4
    $region9: #{tpu_custom_call.1} parent=1 // pred_fallthru
      _
    // Predicated region
    $region10: #{tpu_custom_call.1} parent=1 // pred_check
      _
    $region11: #{tpu_custom_call.1} parent=1 // pred_check_branch
      %38 = sbr.rel (0) target = $region13
    $region12: #{tpu_custom_call.1} parent=1 // pred_region
      %s40 = ssub.s32 128, 128
      %41 = vsyncadd [#allocation6], %s40
      %s42 = sshll.u32 [#allocation7], 4
      %s43 = int_to_ptr.vmem [resolvable:$true] %s42
      %48 = dma.hbm_to_vmem [thread:$0]  %s2, 128, %s43, [#allocation6], 64, 64, 4
    $region13: #{tpu_custom_call.1} parent=1 // pred_fallthru
      _
    // Predicated region
    $region14: #{tpu_custom_call.1} parent=1 // pred_check
      _
    $region15: #{tpu_custom_call.1} parent=1 // pred_check_branch
      %50 = sbr.rel (0) target = $region17
    $region16: #{tpu_custom_call.1} parent=1 // pred_region
      _
    $region17: #{tpu_custom_call.1} parent=1 // pred_fallthru
      _
    // Predicated region
    $region18: #{tpu_custom_call.1} parent=1 // pred_check
      _
    $region19: #{tpu_custom_call.1} parent=1 // pred_check_branch
      %52 = sbr.rel (0) target = $region21
    $region20: #{tpu_custom_call.1} parent=1 // pred_region
      _
    $region21: #{tpu_custom_call.1} parent=1 // pred_fallthru
      _
    // Predicated region
    $region22: #{tpu_custom_call.1} parent=1 // pred_check
      _
    $region23: #{tpu_custom_call.1} parent=1 // pred_check_branch
      %54 = sbr.rel (0) target = $region25
    $region24: #{tpu_custom_call.1} parent=1 // pred_region
      %55 = dma.done [#allocation3], 128
    $region25: #{tpu_custom_call.1} parent=1 // pred_fallthru
      _
    // Predicated region
    $region26: #{tpu_custom_call.1} parent=1 // pred_check
      _
    $region27: #{tpu_custom_call.1} parent=1 // pred_check_branch
      %57 = sbr.rel (0) target = $region29
    $region28: #{tpu_custom_call.1} parent=1 // pred_region
      %58 = dma.done [#allocation6], 128
    $region29: #{tpu_custom_call.1} parent=1 // pred_fallthru
      _
    // Predicated region
    $region30: #{tpu_custom_call.1} parent=1 // pred_check
      _
    $region31: #{tpu_custom_call.1} parent=1 // pred_check_branch
      %60 = sbr.rel (0) target = $region33
    $region32: #{tpu_custom_call.1} parent=1 // pred_region
      %61 = dma.done [#allocation6], 128
    $region33: #{tpu_custom_call.1} parent=1 // pred_fallthru
      _
    %s63 = smul.u32 0, 16
    %v64 = vld [vmem:[#allocation2] sm:$0xf]
    %v65 = vld [vmem:[#allocation2 + $0x4] sm:$0xf]
    %v66 = vld [vmem:[#allocation7] sm:$0xf]
    %v67 = vld [vmem:[#allocation7 + $0x4] sm:$0xf]
    %v70 = vunpack.c.l.b16 %v64
    %v71 = vunpack.c.l.b16 %v65
    %v72 = vpack.c.b16 %v71, %v70
    %v75 = vunpack.c.l.b16 %v66
    %v76 = vunpack.c.l.b16 %v67
    %v77 = vpack.c.b16 %v76, %v75
    %vm78 = vcmask 261120
    %v80 = vsel %vm78, %v72, 0
    %v83 = vsel %vm78, %v77, 0
    %85 = vmatprep.subr.bf16.mxu0 0
    %86 = vmatpush1.bf16.xpose.msra.mxu0 %v83
    %87 = vmatprep.subr.bf16.mxu0 0
    %88 = vmatpush1.bf16.xpose.msra.mxu0 0
    %89 = vmatprep.subr.bf16.mxu0 0
    %90 = vmatpush1.bf16.xpose.msra.mxu0 0
    %91 = vmatprep.subr.bf16.mxu0 0
    %92 = vmatpush1.bf16.xpose.msra.mxu0 0
    %93 = vmatprep.subr.bf16.mxu0 0
    %94 = vmatpush1.bf16.xpose.msra.mxu0 0
    %95 = vmatprep.subr.bf16.mxu0 0
    %96 = vmatpush1.bf16.xpose.msra.mxu0 0
    %97 = vmatprep.subr.bf16.mxu0 0
    %98 = vmatpush1.bf16.xpose.msra.mxu0 0
    %99 = vmatprep.subr.bf16.mxu0 0
    %100 = vmatpush1.bf16.xpose.msra.mxu0 0
    %101 = vmatprep.subr.bf16.mxu0 0
    %102 = vmatpush1.bf16.xpose.msra.mxu0 0
    %103 = vmatprep.subr.bf16.mxu0 0
    %104 = vmatpush1.bf16.xpose.msra.mxu0 0
    %105 = vmatprep.subr.bf16.mxu0 0
    %106 = vmatpush1.bf16.xpose.msra.mxu0 0
    %107 = vmatprep.subr.bf16.mxu0 0
    %108 = vmatpush1.bf16.xpose.msra.mxu0 0
    %109 = vmatprep.subr.bf16.mxu0 0
    %110 = vmatpush1.bf16.xpose.msra.mxu0 0
    %111 = vmatprep.subr.bf16.mxu0 0
    %112 = vmatpush1.bf16.xpose.msra.mxu0 0
    %113 = vmatprep.subr.bf16.mxu0 0
    %114 = vmatpush1.bf16.xpose.msra.mxu0 0
    %115 = vmatprep.subr.bf16.mxu0 0
    %116 = vmatpush1.bf16.xpose.msra.mxu0 0
    %117 = vmatprep.mubr.bf16.mxu0 0
    %118 = vmatmul.mubr.bf16.gmra.mrb[0].mxu0 %v80
    %v119 = vpop.f32.mrb[0].mxu0
    %v120 = vadd.f32 0.0, %v119
    %v121 = vpop.f32.mrb[0].mxu0
    %v122 = vpop.f32.mrb[0].mxu0
    %v123 = vadd.f32 0.0, %v122
    %v124 = vpop.f32.mrb[0].mxu0
    %125 = vdwg.mxu0
    %v126 = vmul.f32 %v120, 14.285714
    %v127 = vmul.f32 %v123, 14.285714
    %v128 = vlaneseq
    %v129 = vand.u32 %v128, 127
    %v130 = vlaneseq
    %v131 = vshrl.u32 %v130, 7
    %v132 = vadd.s32 %v131, 8
    %v133 = vstv %s63
    %v134 = vadd.s32 %v133, %v131
    %v135 = vadd.s32 %v133, %v132
    %vm136 = vcmp.ne.s32.totalorder %v129, %v134
    %vm137 = vcmp.ne.s32.totalorder %v129, %v135
    %vm138 = vcmask 130048
    %v139 = vsel %vm138, %v126, -inf
    %140 = vmax.xlane.f32.xlu0 %v139
    %v141 = vpop.xlane.xlu0 %140
    %v142 = vsel %vm138, %v127, -inf
    %143 = vmax.xlane.f32.xlu0 %v142
    %v144 = vpop.xlane.xlu0 %143
    %v145 = vsub.f32 %v126, %v141
    %v146 = vsub.f32 %v127, %v144
    %v147 = vmul.f32 %v145, 1.442695
    %v148 = vpow.pop %v147
    %v149 = vmul.f32 %v146, 1.442695
    %v150 = vpow.pop %v149
    %v151 = vsel %vm136, %v148, 0.0
    %v152 = vsel %vm137, %v150, 0.0
    %v153 = vsel %vm138, %v151, 0.0
    %154 = vadd.xlane.f32.xlu0 %v153
    %v155 = vpop.xlane.xlu0 %154
    %v156 = vsel %vm138, %v152, 0.0
    %157 = vadd.xlane.f32.xlu0 %v156
    %v158 = vpop.xlane.xlu0 %157
    %v159 = vlog2.pop %v155
    %v160 = vmul.f32 %v159, 0.6931472
    %v161 = vlog2.pop %v158
    %v162 = vmul.f32 %v161, 0.6931472
    %v163 = vld [vmem:[#allocation5] sm:$0xf]
    %v164 = vld [vmem:[#allocation5 + $0x4] sm:$0xf]
    %v165 = vld [vmem:[%s3] sm:$0xf]
    %v166 = vld [vmem:[%s4] sm:$0x1]
    %v169 = vunpack.c.l.b16 %v163
    %v170 = vunpack.c.l.b16 %v164
    %v171 = vpack.c.b16 %v170, %v169
    %v173 = vsel %vm138, %v171, 0
    %v176 = vsel %vm138, %v165, 0
    %178 = vmatprep.subr.bf16.mxu0 0
    %179 = vmatpush1.bf16.xpose.msra.mxu0 %v176
    %180 = vmatprep.subr.bf16.mxu0 0
    %181 = vmatpush1.bf16.xpose.msra.mxu0 0
    %182 = vmatprep.subr.bf16.mxu0 0
    %183 = vmatpush1.bf16.xpose.msra.mxu0 0
    %184 = vmatprep.subr.bf16.mxu0 0
    %185 = vmatpush1.bf16.xpose.msra.mxu0 0
    %186 = vmatprep.subr.bf16.mxu0 0
    %187 = vmatpush1.bf16.xpose.msra.mxu0 0
    %188 = vmatprep.subr.bf16.mxu0 0
    %189 = vmatpush1.bf16.xpose.msra.mxu0 0
    %190 = vmatprep.subr.bf16.mxu0 0
    %191 = vmatpush1.bf16.xpose.msra.mxu0 0
    %192 = vmatprep.subr.bf16.mxu0 0
    %193 = vmatpush1.bf16.xpose.msra.mxu0 0
    %194 = vmatprep.subr.bf16.mxu0 0
    %195 = vmatpush1.bf16.xpose.msra.mxu0 0
    %196 = vmatprep.subr.bf16.mxu0 0
    %197 = vmatpush1.bf16.xpose.msra.mxu0 0
    %198 = vmatprep.subr.bf16.mxu0 0
    %199 = vmatpush1.bf16.xpose.msra.mxu0 0
    %200 = vmatprep.subr.bf16.mxu0 0
    %201 = vmatpush1.bf16.xpose.msra.mxu0 0
    %202 = vmatprep.subr.bf16.mxu0 0
    %203 = vmatpush1.bf16.xpose.msra.mxu0 0
    %204 = vmatprep.subr.bf16.mxu0 0
    %205 = vmatpush1.bf16.xpose.msra.mxu0 0
    %206 = vmatprep.subr.bf16.mxu0 0
    %207 = vmatpush1.bf16.xpose.msra.mxu0 0
    %208 = vmatprep.subr.bf16.mxu0 0
    %209 = vmatpush1.bf16.xpose.msra.mxu0 0
    %210 = vmatprep.mubr.bf16.mxu0 0
    %211 = vmatmul.mubr.bf16.gmra.mrb[0].mxu0 %v173
    %v212 = vpop.f32.mrb[0].mxu0
    %v213 = vadd.f32 0.0, %v212
    %v214 = vpop.f32.mrb[0].mxu0
    %v215 = vpop.f32.mrb[0].mxu0
    %v216 = vadd.f32 0.0, %v215
    %v217 = vpop.f32.mrb[0].mxu0
    %218 = vdwg.mxu0
    %v219 = vunpack.c.l.bf16 %v163
    %v220 = vunpack.c.l.bf16 %v164
    %v221 = vsel %vm138, %v219, 0.0
    %222 = vadd.xlane.f32.xlu0 %v221
    %v223 = vpop.xlane.xlu0 %222
    %v224 = vsel %vm138, %v220, 0.0
    %225 = vadd.xlane.f32.xlu0 %v224
    %v226 = vpop.xlane.xlu0 %225
    %v228 = vlaneseq
    %v229 = vshrl.u32 %v228, 7
    %v230 = vsub.s32 0, %v229
    %v231 = vrot.slane %v166, %v230
    %v233 = vadd.f32 %v223, %v231
    %v234 = vadd.f32 %v226, %v231
    %v235 = vsub.f32 %v233, %v213
    %v236 = vsub.f32 %v234, %v216
    %vm237 = vcmp.gt.f32.partialorder %v235, 0.0
    %vm238 = vcmp.gt.f32.partialorder %v236, 0.0
    %v239 = vmul.f32 %v235, 0.3
    %v240 = vmul.f32 %v236, 0.3
    %vm241 = vcmp.ge.f32.partialorder %v213, %v239
    %vm242 = vcmp.ge.f32.partialorder %v216, %v240
    %vm243 = vmand %vm237, %vm241
    %vm244 = vmand %vm238, %vm242
    %v245 = vsel %vm243, 1, 0
    %v246 = vsel %vm244, 1, 0
    %v247 = vcvt.s32.f32 %v245
    %v248 = vcvt.s32.f32 %v246
    %v249 = vrcp.pop %v235
    %v250 = vmul.f32 %v213, %v249
    %v251 = vrcp.pop %v236
    %v252 = vmul.f32 %v216, %v251
    %v253 = vsel %vm237, %v250, 0.0
    %v254 = vsel %vm238, %v252, 0.0
    %v255 = vsel %vm243, %v253, 0.0
    %v256 = vsel %vm244, %v254, 0.0
    %259 = vrot.lane.b32.xlu0 %v247, 8
    %v260 = vpop.permute.xlu0 %259
    %261 = vrot.lane.b32.xlu0 %v248, 8
    %v262 = vpop.permute.xlu0 %261
    %vm265 = vcmask 64512
    %v266 = vsel %vm265, %v247, %v260
    %v267 = vsel %vm265, %v248, %v262
    %v268 = vsel %vm136, %v266, 0.0
    %v269 = vsel %vm137, %v267, 0.0
    %272 = vrot.lane.b32.xlu0 %v255, 8
    %v273 = vpop.permute.xlu0 %272
    %274 = vrot.lane.b32.xlu0 %v256, 8
    %v275 = vpop.permute.xlu0 %274
    %v278 = vsel %vm265, %v255, %v273
    %v279 = vsel %vm265, %v256, %v275
    %v280 = vsel %vm136, %v278, 0.0
    %v281 = vsel %vm137, %v279, 0.0
    %v282 = vsel %vm138, %v280, 0.0
    %283 = vadd.xlane.f32.xlu0 %v282
    %v284 = vpop.xlane.xlu0 %283
    %v285 = vsel %vm138, %v281, 0.0
    %286 = vadd.xlane.f32.xlu0 %v285
    %v287 = vpop.xlane.xlu0 %286
    %v288 = vmul.f32 %v280, %v145
    %v289 = vmul.f32 %v281, %v146
    %v290 = vsel %vm138, %v288, 0.0
    %291 = vadd.xlane.f32.xlu0 %v290
    %v292 = vpop.xlane.xlu0 %291
    %v293 = vsel %vm138, %v289, 0.0
    %294 = vadd.xlane.f32.xlu0 %v293
    %v295 = vpop.xlane.xlu0 %294
    %v296 = vsel %vm138, %v268, 0.0
    %297 = vadd.xlane.f32.xlu0 %v296
    %v298 = vpop.xlane.xlu0 %297
    %v299 = vsel %vm138, %v269, 0.0
    %300 = vadd.xlane.f32.xlu0 %v299
    %v301 = vpop.xlane.xlu0 %300
    %v302 = vmul.f32 %v160, %v284
    %v303 = vmul.f32 %v162, %v287
    %v304 = vsub.f32 %v292, %v302
    %v305 = vsub.f32 %v295, %v303
    %v306 = vmul.f32 %v304, -1.0
    %v307 = vmul.f32 %v305, -1.0
    %v308 = vrcp.pop %v298
    %v309 = vmul.f32 %v306, %v308
    %v310 = vrcp.pop %v301
    %v311 = vmul.f32 %v307, %v310
    %vm312 = vcmp.lt.s32.totalorder %v134, 16
    %vm313 = vcmp.lt.s32.totalorder %v135, 16
    %v314 = vsel %vm312, %v309, 0.0
    %v315 = vsel %vm313, %v311, 0.0
    %316 = vst [vmem:[#allocation8] sm:$0xff] %v314
    %317 = vst [vmem:[#allocation8 + $0x8] sm:$0xff] %v315
    // Predicated region
    $region34: #{tpu_custom_call.1} parent=1 // pred_check
      _
    $region35: #{tpu_custom_call.1} parent=1 // pred_check_branch
      %319 = sbr.rel (0) target = $region37
    $region36: #{tpu_custom_call.1} parent=1 // pred_region
      %s321 = ssub.s32 256, 256
      %322 = vsyncadd [#allocation4], %s321
      %s323 = sshll.u32 [#allocation8], 4
      %s324 = int_to_ptr.vmem [resolvable:$true] %s323
      %329 = dma.vmem_to_hbm [thread:$0]  %s324, 256, %s5, [#allocation4], 128, 128, 8
    $region37: #{tpu_custom_call.1} parent=1 // pred_fallthru
      _
    // Predicated region
    $region38: #{tpu_custom_call.1} parent=1 // pred_check
      _
    $region39: #{tpu_custom_call.1} parent=1 // pred_check_branch
      %331 = sbr.rel (0) target = $region41
    $region40: #{tpu_custom_call.1} parent=1 // pred_region
      %332 = dma.done [#allocation4], 256
    $region41: #{tpu_custom_call.1} parent=1 // pred_fallthru
      _
    %333 = vsyncpa [#allocation3], 1
    %334 = vsyncpa [#allocation6], 1
    %335 = vsyncpa [#allocation4], 1

// kernel: tpu_custom_call.1
$region0: #{tpu_custom_call.1}
  #allocation0 [shape = 'u32[]', space=smem, size = 0x4, offset = 0x4, fixed_abs, tag = 'smem constant byte address 0x4 - core index']
  #allocation1 [shape = 'u32[144,128]{1,0:T(1,128)}', space=vmem, size = 0x12000, scoped, tag = 'internal scratch']
  %s0 = inlined_call_operand.hbm [shape: bf16[16,32], index: 0, kind: input, shape index: {}]
  %s1 = inlined_call_operand.hbm [shape: bf16[16,16], index: 1, kind: input, shape index: {}]
  %s2 = inlined_call_operand.hbm [shape: bf16[16,32], index: 2, kind: input, shape index: {}]
  %s3 = inlined_call_operand.vmem [shape: bf16[8,16], index: 3, kind: input, shape index: {}]
  %s4 = inlined_call_operand.vmem [shape: f32[1,8], index: 4, kind: input, shape index: {}]
  %s5 = inlined_call_operand.hbm [shape: f32[16,128], index: 5, kind: output, shape index: {}]
  %s6 = sld [smem:[#allocation0]]
  $region42: #{tpu_custom_call.1} parent=0
    _
  %s8 = ssub.s32 1, %s6
  %s9 = scalar_select 0, %s8, %s6
  $region1: #{tpu_custom_call.1} parent=0
    #allocation2 [shape = 'u8[4096]{0}', space=vmem, size = 0x1000, scoped, tag = 'input window, operand 0, single buffered']
    #allocation3 [shape = 's32[1]{0}', space=sflag, size = 0x4, scoped, tag = 'scoped memory for tpu_custom_call.1']
    #allocation4 [shape = 's32[1]{0}', space=sflag, size = 0x4, scoped, tag = 'scoped memory for tpu_custom_call.1']
    #allocation5 [shape = 'u8[4096]{0}', space=vmem, size = 0x1000, scoped, tag = 'input window, operand 1, single buffered']
    #allocation6 [shape = 's32[1]{0}', space=sflag, size = 0x4, scoped, tag = 'scoped memory for tpu_custom_call.1']
    #allocation7 [shape = 'u8[4096]{0}', space=vmem, size = 0x1000, scoped, tag = 'input window, operand 2, single buffered']
    #allocation8 [shape = 'u8[8192]{0}', space=vmem, size = 0x2000, scoped, tag = 'output window, operand 0, single buffered']
    %10 = vsyncpa [#allocation3], 0
    %11 = vsyncpa [#allocation6], 0
    %12 = vsyncpa [#allocation4], 0
    // Predicated region
    $region2: #{tpu_custom_call.1} parent=1 // pred_check
      _
    $region3: #{tpu_custom_call.1} parent=1 // pred_check_branch
      %14 = sbr.rel (0) target = $region5
    $region4: #{tpu_custom_call.1} parent=1 // pred_region
      %s16 = ssub.s32 128, 128
      %17 = vsyncadd [#allocation3], %s16
      %s18 = sshll.u32 [#allocation2], 4
      %s19 = int_to_ptr.vmem [resolvable:$true] %s18
      %24 = dma.hbm_to_vmem [thread:$0]  %s0, 128, %s19, [#allocation3], 64, 64, 4
    $region5: #{tpu_custom_call.1} parent=1 // pred_fallthru
      _
    // Predicated region
    $region6: #{tpu_custom_call.1} parent=1 // pred_check
      _
    $region7: #{tpu_custom_call.1} parent=1 // pred_check_branch
      %26 = sbr.rel (0) target = $region9
    $region8: #{tpu_custom_call.1} parent=1 // pred_region
      %s28 = ssub.s32 128, 128
      %29 = vsyncadd [#allocation6], %s28
      %s30 = sshll.u32 [#allocation5], 4
      %s31 = int_to_ptr.vmem [resolvable:$true] %s30
      %36 = dma.hbm_to_vmem [thread:$0]  %s1, 128, %s31, [#allocation6], 64, 64, 4
    $region9: #{tpu_custom_call.1} parent=1 // pred_fallthru
      _
    // Predicated region
    $region10: #{tpu_custom_call.1} parent=1 // pred_check
      _
    $region11: #{tpu_custom_call.1} parent=1 // pred_check_branch
      %38 = sbr.rel (0) target = $region13
    $region12: #{tpu_custom_call.1} parent=1 // pred_region
      %s40 = ssub.s32 128, 128
      %41 = vsyncadd [#allocation6], %s40
      %s42 = sshll.u32 [#allocation7], 4
      %s43 = int_to_ptr.vmem [resolvable:$true] %s42
      %48 = dma.hbm_to_vmem [thread:$0]  %s2, 128, %s43, [#allocation6], 64, 64, 4
    $region13: #{tpu_custom_call.1} parent=1 // pred_fallthru
      _
    // Predicated region
    $region14: #{tpu_custom_call.1} parent=1 // pred_check
      _
    $region15: #{tpu_custom_call.1} parent=1 // pred_check_branch
      %50 = sbr.rel (0) target = $region17
    $region16: #{tpu_custom_call.1} parent=1 // pred_region
      _
    $region17: #{tpu_custom_call.1} parent=1 // pred_fallthru
      _
    // Predicated region
    $region18: #{tpu_custom_call.1} parent=1 // pred_check
      _
    $region19: #{tpu_custom_call.1} parent=1 // pred_check_branch
      %52 = sbr.rel (0) target = $region21
    $region20: #{tpu_custom_call.1} parent=1 // pred_region
      _
    $region21: #{tpu_custom_call.1} parent=1 // pred_fallthru
      _
    // Predicated region
    $region22: #{tpu_custom_call.1} parent=1 // pred_check
      _
    $region23: #{tpu_custom_call.1} parent=1 // pred_check_branch
      %54 = sbr.rel (0) target = $region25
    $region24: #{tpu_custom_call.1} parent=1 // pred_region
      %55 = dma.done [#allocation3], 128
    $region25: #{tpu_custom_call.1} parent=1 // pred_fallthru
      _
    // Predicated region
    $region26: #{tpu_custom_call.1} parent=1 // pred_check
      _
    $region27: #{tpu_custom_call.1} parent=1 // pred_check_branch
      %57 = sbr.rel (0) target = $region29
    $region28: #{tpu_custom_call.1} parent=1 // pred_region
      %58 = dma.done [#allocation6], 128
    $region29: #{tpu_custom_call.1} parent=1 // pred_fallthru
      _
    // Predicated region
    $region30: #{tpu_custom_call.1} parent=1 // pred_check
      _
    $region31: #{tpu_custom_call.1} parent=1 // pred_check_branch
      %60 = sbr.rel (0) target = $region33
    $region32: #{tpu_custom_call.1} parent=1 // pred_region
      %61 = dma.done [#allocation6], 128
    $region33: #{tpu_custom_call.1} parent=1 // pred_fallthru
      _
    %s63 = smul.u32 0, 16
    %v64 = vld [vmem:[#allocation2] sm:$0xf]
    %v65 = vld [vmem:[#allocation2 + $0x4] sm:$0xf]
    %v66 = vld [vmem:[#allocation7] sm:$0xf]
    %v67 = vld [vmem:[#allocation7 + $0x4] sm:$0xf]
    %v70 = vunpack.c.l.b16 %v64
    %v71 = vunpack.c.l.b16 %v65
    %v72 = vpack.c.b16 %v71, %v70
    %v75 = vunpack.c.l.b16 %v66
    %v76 = vunpack.c.l.b16 %v67
    %v77 = vpack.c.b16 %v76, %v75
    %vm78 = vcmask 261120
    %v80 = vsel %vm78, %v72, 0
    %v83 = vsel %vm78, %v77, 0
    %85 = vmatprep.subr.bf16.mxu0 0
    %86 = vmatpush1.bf16.xpose.msra.mxu0 %v83
    %87 = vmatprep.subr.bf16.mxu0 0
    %88 = vmatpush1.bf16.xpose.msra.mxu0 0
    %89 = vmatprep.subr.bf16.mxu0 0
    %90 = vmatpush1.bf16.xpose.msra.mxu0 0
    %91 = vmatprep.subr.bf16.mxu0 0
    %92 = vmatpush1.bf16.xpose.msra.mxu0 0
    %93 = vmatprep.subr.bf16.mxu0 0
    %94 = vmatpush1.bf16.xpose.msra.mxu0 0
    %95 = vmatprep.subr.bf16.mxu0 0
    %96 = vmatpush1.bf16.xpose.msra.mxu0 0
    %97 = vmatprep.subr.bf16.mxu0 0
    %98 = vmatpush1.bf16.xpose.msra.mxu0 0
    %99 = vmatprep.subr.bf16.mxu0 0
    %100 = vmatpush1.bf16.xpose.msra.mxu0 0
    %101 = vmatprep.subr.bf16.mxu0 0
    %102 = vmatpush1.bf16.xpose.msra.mxu0 0
    %103 = vmatprep.subr.bf16.mxu0 0
    %104 = vmatpush1.bf16.xpose.msra.mxu0 0
    %105 = vmatprep.subr.bf16.mxu0 0
    %106 = vmatpush1.bf16.xpose.msra.mxu0 0
    %107 = vmatprep.subr.bf16.mxu0 0
    %108 = vmatpush1.bf16.xpose.msra.mxu0 0
    %109 = vmatprep.subr.bf16.mxu0 0
    %110 = vmatpush1.bf16.xpose.msra.mxu0 0
    %111 = vmatprep.subr.bf16.mxu0 0
    %112 = vmatpush1.bf16.xpose.msra.mxu0 0
    %113 = vmatprep.subr.bf16.mxu0 0
    %114 = vmatpush1.bf16.xpose.msra.mxu0 0
    %115 = vmatprep.subr.bf16.mxu0 0
    %116 = vmatpush1.bf16.xpose.msra.mxu0 0
    %117 = vmatprep.mubr.bf16.mxu0 0
    %118 = vmatmul.mubr.bf16.gmra.mrb[0].mxu0 %v80
    %v119 = vpop.f32.mrb[0].mxu0
    %v120 = vadd.f32 0.0, %v119
    %v121 = vpop.f32.mrb[0].mxu0
    %v122 = vpop.f32.mrb[0].mxu0
    %v123 = vadd.f32 0.0, %v122
    %v124 = vpop.f32.mrb[0].mxu0
    %125 = vdwg.mxu0
    %v126 = vmul.f32 %v120, 14.285714
    %v127 = vmul.f32 %v123, 14.285714
    %v128 = vlaneseq
    %v129 = vand.u32 %v128, 127
    %v130 = vlaneseq
    %v131 = vshrl.u32 %v130, 7
    %v132 = vadd.s32 %v131, 8
    %v133 = vstv %s63
    %v134 = vadd.s32 %v133, %v131
    %v135 = vadd.s32 %v133, %v132
    %vm136 = vcmp.ne.s32.totalorder %v129, %v134
    %vm137 = vcmp.ne.s32.totalorder %v129, %v135
    %vm138 = vcmask 130048
    %v139 = vsel %vm138, %v126, -inf
    %140 = vmax.xlane.f32.xlu0 %v139
    %v141 = vpop.xlane.xlu0 %140
    %v142 = vsel %vm138, %v127, -inf
    %143 = vmax.xlane.f32.xlu0 %v142
    %v144 = vpop.xlane.xlu0 %143
    %v145 = vsub.f32 %v126, %v141
    %v146 = vsub.f32 %v127, %v144
    %v147 = vmul.f32 %v145, 1.442695
    %v148 = vpow.pop %v147
    %v149 = vmul.f32 %v146, 1.442695
    %v150 = vpow.pop %v149
    %v151 = vsel %vm136, %v148, 0.0
    %v152 = vsel %vm137, %v150, 0.0
    %v153 = vsel %vm138, %v151, 0.0
    %154 = vadd.xlane.f32.xlu0 %v153
    %v155 = vpop.xlane.xlu0 %154
    %v156 = vsel %vm138, %v152, 0.0
    %157 = vadd.xlane.f32.xlu0 %v156
    %v158 = vpop.xlane.xlu0 %157
    %v159 = vlog2.pop %v155
    %v160 = vmul.f32 %v159, 0.6931472
    %v161 = vlog2.pop %v158
    %v162 = vmul.f32 %v161, 0.6931472
    %v163 = vld [vmem:[#allocation5] sm:$0xf]
    %v164 = vld [vmem:[#allocation5 + $0x4] sm:$0xf]
    %v165 = vld [vmem:[%s3] sm:$0xf]
    %v166 = vld [vmem:[%s4] sm:$0x1]
    %v169 = vunpack.c.l.b16 %v163
    %v170 = vunpack.c.l.b16 %v164
    %v171 = vpack.c.b16 %v170, %v169
    %v173 = vsel %vm138, %v171, 0
    %v176 = vsel %vm138, %v165, 0
    %178 = vmatprep.subr.bf16.mxu0 0
    %179 = vmatpush1.bf16.xpose.msra.mxu0 %v176
    %180 = vmatprep.subr.bf16.mxu0 0
    %181 = vmatpush1.bf16.xpose.msra.mxu0 0
    %182 = vmatprep.subr.bf16.mxu0 0
    %183 = vmatpush1.bf16.xpose.msra.mxu0 0
    %184 = vmatprep.subr.bf16.mxu0 0
    %185 = vmatpush1.bf16.xpose.msra.mxu0 0
    %186 = vmatprep.subr.bf16.mxu0 0
    %187 = vmatpush1.bf16.xpose.msra.mxu0 0
    %188 = vmatprep.subr.bf16.mxu0 0
    %189 = vmatpush1.bf16.xpose.msra.mxu0 0
    %190 = vmatprep.subr.bf16.mxu0 0
    %191 = vmatpush1.bf16.xpose.msra.mxu0 0
    %192 = vmatprep.subr.bf16.mxu0 0
    %193 = vmatpush1.bf16.xpose.msra.mxu0 0
    %194 = vmatprep.subr.bf16.mxu0 0
    %195 = vmatpush1.bf16.xpose.msra.mxu0 0
    %196 = vmatprep.subr.bf16.mxu0 0
    %197 = vmatpush1.bf16.xpose.msra.mxu0 0
    %198 = vmatprep.subr.bf16.mxu0 0
    %199 = vmatpush1.bf16.xpose.msra.mxu0 0
    %200 = vmatprep.subr.bf16.mxu0 0
    %201 = vmatpush1.bf16.xpose.msra.mxu0 0
    %202 = vmatprep.subr.bf16.mxu0 0
    %203 = vmatpush1.bf16.xpose.msra.mxu0 0
    %204 = vmatprep.subr.bf16.mxu0 0
    %205 = vmatpush1.bf16.xpose.msra.mxu0 0
    %206 = vmatprep.subr.bf16.mxu0 0
    %207 = vmatpush1.bf16.xpose.msra.mxu0 0
    %208 = vmatprep.subr.bf16.mxu0 0
    %209 = vmatpush1.bf16.xpose.msra.mxu0 0
    %210 = vmatprep.mubr.bf16.mxu0 0
    %211 = vmatmul.mubr.bf16.gmra.mrb[0].mxu0 %v173
    %v212 = vpop.f32.mrb[0].mxu0
    %v213 = vadd.f32 0.0, %v212
    %v214 = vpop.f32.mrb[0].mxu0
    %v215 = vpop.f32.mrb[0].mxu0
    %v216 = vadd.f32 0.0, %v215
    %v217 = vpop.f32.mrb[0].mxu0
    %218 = vdwg.mxu0
    %v219 = vunpack.c.l.bf16 %v163
    %v220 = vunpack.c.l.bf16 %v164
    %v221 = vsel %vm138, %v219, 0.0
    %222 = vadd.xlane.f32.xlu0 %v221
    %v223 = vpop.xlane.xlu0 %222
    %v224 = vsel %vm138, %v220, 0.0
    %225 = vadd.xlane.f32.xlu0 %v224
    %v226 = vpop.xlane.xlu0 %225
    %v228 = vlaneseq
    %v229 = vshrl.u32 %v228, 7
    %v230 = vsub.s32 0, %v229
    %v231 = vrot.slane %v166, %v230
    %v233 = vadd.f32 %v223, %v231
    %v234 = vadd.f32 %v226, %v231
    %v235 = vsub.f32 %v233, %v213
    %v236 = vsub.f32 %v234, %v216
    %vm237 = vcmp.gt.f32.partialorder %v235, 0.0
    %vm238 = vcmp.gt.f32.partialorder %v236, 0.0
    %v239 = vmul.f32 %v235, 0.3
    %v240 = vmul.f32 %v236, 0.3
    %vm241 = vcmp.ge.f32.partialorder %v213, %v239
    %vm242 = vcmp.ge.f32.partialorder %v216, %v240
    %vm243 = vmand %vm237, %vm241
    %vm244 = vmand %vm238, %vm242
    %v245 = vsel %vm243, 1, 0
    %v246 = vsel %vm244, 1, 0
    %v247 = vcvt.s32.f32 %v245
    %v248 = vcvt.s32.f32 %v246
    %v249 = vrcp.pop %v235
    %v250 = vmul.f32 %v213, %v249
    %v251 = vrcp.pop %v236
    %v252 = vmul.f32 %v216, %v251
    %v253 = vsel %vm237, %v250, 0.0
    %v254 = vsel %vm238, %v252, 0.0
    %v255 = vsel %vm243, %v253, 0.0
    %v256 = vsel %vm244, %v254, 0.0
    %259 = vrot.lane.b32.xlu0 %v247, 8
    %v260 = vpop.permute.xlu0 %259
    %261 = vrot.lane.b32.xlu0 %v248, 8
    %v262 = vpop.permute.xlu0 %261
    %vm265 = vcmask 64512
    %v266 = vsel %vm265, %v247, %v260
    %v267 = vsel %vm265, %v248, %v262
    %v268 = vsel %vm136, %v266, 0.0
    %v269 = vsel %vm137, %v267, 0.0
    %272 = vrot.lane.b32.xlu0 %v255, 8
    %v273 = vpop.permute.xlu0 %272
    %274 = vrot.lane.b32.xlu0 %v256, 8
    %v275 = vpop.permute.xlu0 %274
    %v278 = vsel %vm265, %v255, %v273
    %v279 = vsel %vm265, %v256, %v275
    %v280 = vsel %vm136, %v278, 0.0
    %v281 = vsel %vm137, %v279, 0.0
    %v282 = vsel %vm138, %v280, 0.0
    %283 = vadd.xlane.f32.xlu0 %v282
    %v284 = vpop.xlane.xlu0 %283
    %v285 = vsel %vm138, %v281, 0.0
    %286 = vadd.xlane.f32.xlu0 %v285
    %v287 = vpop.xlane.xlu0 %286
    %v288 = vmul.f32 %v280, %v145
    %v289 = vmul.f32 %v281, %v146
    %v290 = vsel %vm138, %v288, 0.0
    %291 = vadd.xlane.f32.xlu0 %v290
    %v292 = vpop.xlane.xlu0 %291
    %v293 = vsel %vm138, %v289, 0.0
    %294 = vadd.xlane.f32.xlu0 %v293
    %v295 = vpop.xlane.xlu0 %294
    %v296 = vsel %vm138, %v268, 0.0
    %297 = vadd.xlane.f32.xlu0 %v296
    %v298 = vpop.xlane.xlu0 %297
    %v299 = vsel %vm138, %v269, 0.0
    %300 = vadd.xlane.f32.xlu0 %v299
    %v301 = vpop.xlane.xlu0 %300
    %v302 = vmul.f32 %v160, %v284
    %v303 = vmul.f32 %v162, %v287
    %v304 = vsub.f32 %v292, %v302
    %v305 = vsub.f32 %v295, %v303
    %v306 = vmul.f32 %v304, -1.0
    %v307 = vmul.f32 %v305, -1.0
    %v308 = vrcp.pop %v298
    %v309 = vmul.f32 %v306, %v308
    %v310 = vrcp.pop %v301
    %v311 = vmul.f32 %v307, %v310
    %vm312 = vcmp.lt.s32.totalorder %v134, 16
    %vm313 = vcmp.lt.s32.totalorder %v135, 16
    %v314 = vsel %vm312, %v309, 0.0
    %v315 = vsel %vm313, %v311, 0.0
    %316 = vst [vmem:[#allocation8] sm:$0xff] %v314
    %317 = vst [vmem:[#allocation8 + $0x8] sm:$0xff] %v315
    // Predicated region
    $region34: #{tpu_custom_call.1} parent=1 // pred_check
      _
    $region35: #{tpu_custom_call.1} parent=1 // pred_check_branch
      %319 = sbr.rel (0) target = $region37
    $region36: #{tpu_custom_call.1} parent=1 // pred_region
      %s321 = ssub.s32 256, 256
      %322 = vsyncadd [#allocation4], %s321
      %s323 = sshll.u32 [#allocation8], 4
      %s324 = int_to_ptr.vmem [resolvable:$true] %s323
      %329 = dma.vmem_to_hbm [thread:$0]  %s324, 256, %s5, [#allocation4], 128, 128, 8
    $region37: #{tpu_custom_call.1} parent=1 // pred_fallthru
      _
    // Predicated region
    $region38: #{tpu_custom_call.1} parent=1 // pred_check
      _
    $region39: #{tpu_custom_call.1} parent=1 // pred_check_branch
      %331 = sbr.rel (0) target = $region41
    $region40: #{tpu_custom_call.1} parent=1 // pred_region
      %332 = dma.done [#allocation4], 256
    $region41: #{tpu_custom_call.1} parent=1 // pred_fallthru
      _
    %333 = vsyncpa [#allocation3], 1
    %334 = vsyncpa [#allocation6], 1
    %335 = vsyncpa [#allocation4], 1

</llo_original>
